<compile_context>
chip_gen: v6e
topology: v6e:2x2x1
jax: 0.10.0
libtpu: 0.0.40
codegen_flags: <defaults>
</compile_context>

<pallas_src>
import jax
import jax.numpy as jnp
from jax.experimental import pallas as pl
from jax.experimental.pallas import tpu as pltpu

EPS = 1e-5
IN_F = 9
HID = 16
N_BLOCKS = 3
MISC_COLS = 1 + 3 * N_BLOCKS + 1  # b1_folded | (br,scale,shift)x3 | bout

# VMEM budgeting for the batch-tile choice (per-lane live bytes, conservative):
#   x tile   [9->16, tb] f32, double-buffered : 128 B/lane
#   out tile [1->8,  tb] f32, double-buffered :  64 B/lane
#   live [16, tb] f32 intermediates (~3)      : 192 B/lane
#   bf16 dot-operand copies                   : ~32 B/lane
_BYTES_PER_LANE = 512
_VMEM_BUDGET_BYTES = 24 << 20          # keeps us well under the 48 MiB limit below
_VMEM_LIMIT_BYTES = 48 << 20           # < v7x 64 MiB/TC physical; << v5e/v6e 128 MiB
_DEFAULT_TB = 32768                    # sweet spot per review (sweep 16K-32K)
_MIN_TILES = 4                         # >=2 tiles per TC on v7x + pipeline overlap


def residual_nn_kernel(
    x_ref,      # [9,  TB]  f32   input tile (features x batch)
    w1_ref,     # [16, 9]   bf16  layer1 weight with bn1 folded in   [out, in]
    wr_ref,     # [3,16,16] bf16  residual-block weights             [out, in]
    wout_ref,   # [1, 16]   bf16  output weight                      [out, in]
    misc_ref,   # [16, 11]  f32   packed small params (see pack_params)
    o_ref,      # [1,  TB]  f32   sigmoid output tile (lane-dense)
):
    x = x_ref[...].astype(jnp.bfloat16)          # [9, TB]
    misc = misc_ref[...]                         # [16, 11] f32

    # x = bn1(layer1(x)) — bn1 pre-folded into w1/b1 on the host.
    b1 = misc[:, 0:1]                            # [16, 1]
    h = jnp.dot(w1_ref[...], x, preferred_element_type=jnp.float32) + b1

    # Three residual blocks (static unroll); elementwise chain stays f32.
    for blk in range(N_BLOCKS):
        col = 1 + 3 * blk
        bias = misc[:, col:col + 1]              # [16, 1]
        scale = misc[:, col + 1:col + 2]
        shift = misc[:, col + 2:col + 3]

        residual = h
        z = jnp.dot(wr_ref[blk], h.astype(jnp.bfloat16),
                    preferred_element_type=jnp.float32) + bias
        z = jnp.maximum(z, 0.0)                  # relu(layer1(x))
        z = z * scale + shift                    # bn1 (folded affine)
        # dropout(p=0.1) -> identity in eval mode
        h = jnp.maximum(z + residual, 0.0)

    # x = sigmoid(output(x)) — lane-dense [1, TB] result, EUP-only epilogue.
    bout = misc[0:1, MISC_COLS - 1:MISC_COLS]    # [1, 1]
    logits = jnp.dot(wout_ref[...], h.astype(jnp.bfloat16),
                     preferred_element_type=jnp.float32) + bout
    e = jnp.exp(-logits)                                       # EUP
    o_ref[...] = pl.reciprocal(1.0 + e, approx=True)            # EUP vrcp


def _round_up(n, m):
    return ((n + m - 1) // m) * m


def _choose_tb(b_pad, desired_tb):
    """Batch-tile size: big (amortize grid-step overhead), VMEM-capped,
    and small enough that large batches get >= _MIN_TILES tiles."""
    vmem_cap = (_VMEM_BUDGET_BYTES // _BYTES_PER_LANE) // 128 * 128
    tb = min(desired_tb, vmem_cap)
    per_tile = _round_up(pl.cdiv(b_pad, _MIN_TILES), 128)
    tb = min(tb, per_tile)
    return max(tb, 128)


def residual_nn_forward(x, kernel_params, *, desired_tb=_DEFAULT_TB,
                        feature_major=False):
    """Forward pass.

    x: [B, 9] f32 (PyTorch layout), or [9, B] if feature_major=True
       (zero-copy fast path — preferred for large B, avoids the host transpose).
    Returns [B, 1] f32.
    """
    w1f, wr, wout, misc = kernel_params

    if feature_major:
        xt = x.astype(jnp.float32)               # [9, B]
        B = x.shape[1]
    else:
        # TODO(synk): producers should hand over feature-major [9, B] input to
        # skip this extra XLA transpose of the whole input through HBM.
        B = x.shape[0]
        xt = x.astype(jnp.float32).T             # [9, B]

    # Pad only to a multiple of 128 lanes (not to a multiple of tb).
    b_pad = _round_up(max(B, 1), 128)
    if b_pad != B:
        xt = jnp.pad(xt, ((0, 0), (0, b_pad - B)))

    tb = _choose_tb(b_pad, desired_tb)
    grid = (pl.cdiv(b_pad, tb),)                 # short final tile allowed

    const2 = lambda i: (0, 0)
    const3 = lambda i: (0, 0, 0)

    out = pl.pallas_call(
        residual_nn_kernel,
        out_shape=jax.ShapeDtypeStruct((1, b_pad), jnp.float32),
        grid=grid,
        in_specs=[
            pl.BlockSpec((IN_F, tb), lambda i: (0, i)),       # x: pipelined per tile
            pl.BlockSpec((HID, IN_F), const2),                # weights: resident
            pl.BlockSpec((N_BLOCKS, HID, HID), const3),
            pl.BlockSpec((1, HID), const2),
            pl.BlockSpec((HID, MISC_COLS), const2),
        ],
        out_specs=pl.BlockSpec((1, tb), lambda i: (0, i)),
        compiler_params=pltpu.CompilerParams(
            dimension_semantics=("parallel",),
            vmem_limit_bytes=_VMEM_LIMIT_BYTES),
    )(xt, w1f, wr, wout, misc)

    return out[0, :B][:, None]


# --------------------------------------------------------------------------
# Parameter handling
# --------------------------------------------------------------------------

def init_torch_params(key):
    """Deterministic params in PyTorch layout (weights are [out, in])."""
    ks = jax.random.split(key, 16)

    w1 = 0.1 * jax.random.normal(ks[0], (HID, IN_F), jnp.float32)
    b1 = 0.05 * jax.random.normal(ks[1], (HID,), jnp.float32)

    # 4 batchnorms: bn1 + one per residual block
    bn_g = 1.0 + 0.1 * jax.random.normal(ks[2], (4, HID), jnp.float32)
    bn_b = 0.05 * jax.random.normal(ks[3], (4, HID), jnp.float32)
    bn_m = 0.1 * jax.random.normal(ks[4], (4, HID), jnp.float32)
    bn_v = 1.0 + 0.1 * jnp.abs(jax.random.normal(ks[5], (4, HID), jnp.float32))

    wr = jnp.stack([0.1 * jax.random.normal(ks[6 + i], (HID, HID), jnp.float32)
                    for i in range(N_BLOCKS)], axis=0)               # [3,16,16]
    br = 0.05 * jax.random.normal(ks[9], (N_BLOCKS, HID), jnp.float32)

    wout = 0.1 * jax.random.normal(ks[10], (1, HID), jnp.float32)
    bout = 0.05 * jax.random.normal(ks[11], (1,), jnp.float32)

    return dict(w1=w1, b1=b1, bn_g=bn_g, bn_b=bn_b, bn_m=bn_m, bn_v=bn_v,
                wr=wr, br=br, wout=wout, bout=bout)


def pack_params(tp):
    """Fold BNs to affine form, coalesce small params, pre-cast matmul
    operands to bf16 (matches jnp.dot's DEFAULT TPU MXU precision)."""
    scale = tp["bn_g"] * jax.lax.rsqrt(tp["bn_v"] + EPS)   # [4,16]
    shift = tp["bn_b"] - tp["bn_m"] * scale                # [4,16]

    # bn1 folds straight into layer1 (no nonlinearity between them).
    w1f = tp["w1"] * scale[0][:, None]                     # [16, 9]
    b1f = tp["b1"] * scale[0] + shift[0]                   # [16]

    misc = jnp.zeros((HID, MISC_COLS), jnp.float32)
    misc = misc.at[:, 0].set(b1f)
    for blk in range(N_BLOCKS):
        c = 1 + 3 * blk
        misc = misc.at[:, c].set(tp["br"][blk])
        misc = misc.at[:, c + 1].set(scale[blk + 1])
        misc = misc.at[:, c + 2].set(shift[blk + 1])
    misc = misc.at[0, MISC_COLS - 1].set(tp["bout"][0])

    return (w1f.astype(jnp.bfloat16),
            tp["wr"].astype(jnp.bfloat16),
            tp["wout"].astype(jnp.bfloat16),
            misc)


def reference_forward(x, tp):
    """Pure-JAX reference matching the PyTorch module (eval mode)."""
    def bn(h, k):
        return ((h - tp["bn_m"][k])
                * (tp["bn_g"][k] / jnp.sqrt(tp["bn_v"][k] + EPS))
                + tp["bn_b"][k])

    h = bn(x @ tp["w1"].T + tp["b1"], 0)
    for blk in range(N_BLOCKS):
        res = h
        z = jnp.maximum(h @ tp["wr"][blk].T + tp["br"][blk], 0.0)
        z = bn(z, blk + 1)
        h = jnp.maximum(z + res, 0.0)
    return jax.nn.sigmoid(h @ tp["wout"].T + tp["bout"])


if __name__ == "__main__":
    key = jax.random.PRNGKey(0)
    kx, kp = jax.random.split(key)

    torch_params = init_torch_params(kp)
    kernel_params = pack_params(torch_params)

    # Small batch (single tile) + a non-multiple-of-128 batch that exercises the
    # cdiv grid / short final tile, through both input layouts.
    # bf16 dot operands + approx reciprocal => ~1e-3 level agreement with the
    # f32 reference (PyTorch-equivalent eval-mode math).
    for B in (8, 333):
        x = jax.random.normal(kx, (B, IN_F), jnp.float32)
        ref = reference_forward(x, torch_params)

        out = jax.block_until_ready(residual_nn_forward(x, kernel_params))
        assert out.shape == (B, 1), out.shape
        assert jnp.allclose(out, ref, atol=2e-3, rtol=2e-3), (B, out, ref)

        out_fm = jax.block_until_ready(
            residual_nn_forward(x.T, kernel_params, feature_major=True))
        assert out_fm.shape == (B, 1), out_fm.shape
        assert jnp.allclose(out_fm, ref, atol=2e-3, rtol=2e-3), (B, out_fm, ref)

    print("KERNEL_OK")
</pallas_src>

<mosaic_0001>
module attributes {stable_mosaic.version = 11 : i64} {
  func.func @residual_nn_kernel(%arg0: i32, %arg1: memref<9x128xf32, #tpu.memory_space<vmem>>, %arg2: memref<16x9xbf16, #tpu.memory_space<vmem>>, %arg3: memref<3x16x16xbf16, #tpu.memory_space<vmem>>, %arg4: memref<1x16xbf16, #tpu.memory_space<vmem>>, %arg5: memref<16x11xf32, #tpu.memory_space<vmem>>, %arg6: memref<1x128xf32, #tpu.memory_space<vmem>>) attributes {dimension_semantics = [#tpu.dimension_semantics<parallel>], iteration_bounds = array<i64: 1>, scalar_prefetch = 0 : i64, scratch_operands = 0 : i64, tpu.core_type = #tpu.core_type<tc>, window_params = [{transform_indices = @transform_0, window_bounds = array<i64: 9, 128>}, {pipeline_mode = #tpu.pipeline_mode<synchronous>, transform_indices = @transform_1, window_bounds = array<i64: 16, 9>}, {pipeline_mode = #tpu.pipeline_mode<synchronous>, transform_indices = @transform_2, window_bounds = array<i64: 3, 16, 16>}, {pipeline_mode = #tpu.pipeline_mode<synchronous>, transform_indices = @transform_3, window_bounds = array<i64: 1, 16>}, {pipeline_mode = #tpu.pipeline_mode<synchronous>, transform_indices = @transform_4, window_bounds = array<i64: 16, 11>}, {transform_indices = @transform_5, window_bounds = array<i64: 1, 128>}]} {
    %c0 = arith.constant 0 : index
    %c0_0 = arith.constant 0 : index
    %0 = vector.load %arg1[%c0, %c0_0] : memref<9x128xf32, #tpu.memory_space<vmem>>, vector<9x128xf32>
    %1 = arith.truncf %0 : vector<9x128xf32> to vector<9x128xbf16>
    %c0_1 = arith.constant 0 : index
    %c0_2 = arith.constant 0 : index
    %2 = vector.load %arg5[%c0_1, %c0_2] : memref<16x11xf32, #tpu.memory_space<vmem>>, vector<16x11xf32>
    %3 = vector.extract_strided_slice %2 {offsets = [0, 0], sizes = [16, 1], strides = [1, 1]} : vector<16x11xf32> to vector<16x1xf32>
    %c0_3 = arith.constant 0 : index
    %c0_4 = arith.constant 0 : index
    %4 = vector.load %arg2[%c0_3, %c0_4] : memref<16x9xbf16, #tpu.memory_space<vmem>>, vector<16x9xbf16>
    %cst = arith.constant dense<0.000000e+00> : vector<16x128xf32>
    %5 = tpu.matmul %4, %1, %cst {dimension_numbers = #tpu.dot_dimension_numbers<[1], [0], [0], [1], [0, 0, 1, 1], [], []>} : vector<16x9xbf16>, vector<9x128xbf16>, vector<16x128xf32> -> vector<16x128xf32>
    %6 = vector.broadcast %3 : vector<16x1xf32> to vector<16x128xf32>
    %7 = arith.addf %5, %6 : vector<16x128xf32>
    %8 = vector.extract_strided_slice %2 {offsets = [0, 1], sizes = [16, 1], strides = [1, 1]} : vector<16x11xf32> to vector<16x1xf32>
    %9 = vector.extract_strided_slice %2 {offsets = [0, 2], sizes = [16, 1], strides = [1, 1]} : vector<16x11xf32> to vector<16x1xf32>
    %10 = vector.extract_strided_slice %2 {offsets = [0, 3], sizes = [16, 1], strides = [1, 1]} : vector<16x11xf32> to vector<16x1xf32>
    %c0_5 = arith.constant 0 : index
    %c0_6 = arith.constant 0 : index
    %c0_7 = arith.constant 0 : index
    %11 = vector.load %arg3[%c0_5, %c0_6, %c0_7] : memref<3x16x16xbf16, #tpu.memory_space<vmem>>, vector<1x16x16xbf16>
    %12 = vector.shape_cast %11 : vector<1x16x16xbf16> to vector<16x16xbf16>
    %13 = arith.truncf %7 : vector<16x128xf32> to vector<16x128xbf16>
    %cst_8 = arith.constant dense<0.000000e+00> : vector<16x128xf32>
    %14 = tpu.matmul %12, %13, %cst_8 {dimension_numbers = #tpu.dot_dimension_numbers<[1], [0], [0], [1], [0, 0, 1, 1], [], []>} : vector<16x16xbf16>, vector<16x128xbf16>, vector<16x128xf32> -> vector<16x128xf32>
    %15 = vector.broadcast %8 : vector<16x1xf32> to vector<16x128xf32>
    %16 = arith.addf %14, %15 : vector<16x128xf32>
    %cst_9 = arith.constant 0.000000e+00 : f32
    %17 = vector.broadcast %cst_9 : f32 to vector<16x128xf32>
    %18 = arith.maximumf %16, %17 : vector<16x128xf32>
    %19 = vector.broadcast %9 : vector<16x1xf32> to vector<16x128xf32>
    %20 = arith.mulf %18, %19 : vector<16x128xf32>
    %21 = vector.broadcast %10 : vector<16x1xf32> to vector<16x128xf32>
    %22 = arith.addf %20, %21 : vector<16x128xf32>
    %23 = arith.addf %22, %7 : vector<16x128xf32>
    %cst_10 = arith.constant 0.000000e+00 : f32
    %24 = vector.broadcast %cst_10 : f32 to vector<16x128xf32>
    %25 = arith.maximumf %23, %24 : vector<16x128xf32>
    %26 = vector.extract_strided_slice %2 {offsets = [0, 4], sizes = [16, 1], strides = [1, 1]} : vector<16x11xf32> to vector<16x1xf32>
    %27 = vector.extract_strided_slice %2 {offsets = [0, 5], sizes = [16, 1], strides = [1, 1]} : vector<16x11xf32> to vector<16x1xf32>
    %28 = vector.extract_strided_slice %2 {offsets = [0, 6], sizes = [16, 1], strides = [1, 1]} : vector<16x11xf32> to vector<16x1xf32>
    %c1 = arith.constant 1 : index
    %c0_11 = arith.constant 0 : index
    %c0_12 = arith.constant 0 : index
    %29 = vector.load %arg3[%c1, %c0_11, %c0_12] : memref<3x16x16xbf16, #tpu.memory_space<vmem>>, vector<1x16x16xbf16>
    %30 = vector.shape_cast %29 : vector<1x16x16xbf16> to vector<16x16xbf16>
    %31 = arith.truncf %25 : vector<16x128xf32> to vector<16x128xbf16>
    %cst_13 = arith.constant dense<0.000000e+00> : vector<16x128xf32>
    %32 = tpu.matmul %30, %31, %cst_13 {dimension_numbers = #tpu.dot_dimension_numbers<[1], [0], [0], [1], [0, 0, 1, 1], [], []>} : vector<16x16xbf16>, vector<16x128xbf16>, vector<16x128xf32> -> vector<16x128xf32>
    %33 = vector.broadcast %26 : vector<16x1xf32> to vector<16x128xf32>
    %34 = arith.addf %32, %33 : vector<16x128xf32>
    %cst_14 = arith.constant 0.000000e+00 : f32
    %35 = vector.broadcast %cst_14 : f32 to vector<16x128xf32>
    %36 = arith.maximumf %34, %35 : vector<16x128xf32>
    %37 = vector.broadcast %27 : vector<16x1xf32> to vector<16x128xf32>
    %38 = arith.mulf %36, %37 : vector<16x128xf32>
    %39 = vector.broadcast %28 : vector<16x1xf32> to vector<16x128xf32>
    %40 = arith.addf %38, %39 : vector<16x128xf32>
    %41 = arith.addf %40, %25 : vector<16x128xf32>
    %cst_15 = arith.constant 0.000000e+00 : f32
    %42 = vector.broadcast %cst_15 : f32 to vector<16x128xf32>
    %43 = arith.maximumf %41, %42 : vector<16x128xf32>
    %44 = vector.extract_strided_slice %2 {offsets = [0, 7], sizes = [16, 1], strides = [1, 1]} : vector<16x11xf32> to vector<16x1xf32>
    %45 = vector.extract_strided_slice %2 {offsets = [0, 8], sizes = [16, 1], strides = [1, 1]} : vector<16x11xf32> to vector<16x1xf32>
    %46 = vector.extract_strided_slice %2 {offsets = [0, 9], sizes = [16, 1], strides = [1, 1]} : vector<16x11xf32> to vector<16x1xf32>
    %c2 = arith.constant 2 : index
    %c0_16 = arith.constant 0 : index
    %c0_17 = arith.constant 0 : index
    %47 = vector.load %arg3[%c2, %c0_16, %c0_17] : memref<3x16x16xbf16, #tpu.memory_space<vmem>>, vector<1x16x16xbf16>
    %48 = vector.shape_cast %47 : vector<1x16x16xbf16> to vector<16x16xbf16>
    %49 = arith.truncf %43 : vector<16x128xf32> to vector<16x128xbf16>
    %cst_18 = arith.constant dense<0.000000e+00> : vector<16x128xf32>
    %50 = tpu.matmul %48, %49, %cst_18 {dimension_numbers = #tpu.dot_dimension_numbers<[1], [0], [0], [1], [0, 0, 1, 1], [], []>} : vector<16x16xbf16>, vector<16x128xbf16>, vector<16x128xf32> -> vector<16x128xf32>
    %51 = vector.broadcast %44 : vector<16x1xf32> to vector<16x128xf32>
    %52 = arith.addf %50, %51 : vector<16x128xf32>
    %cst_19 = arith.constant 0.000000e+00 : f32
    %53 = vector.broadcast %cst_19 : f32 to vector<16x128xf32>
    %54 = arith.maximumf %52, %53 : vector<16x128xf32>
    %55 = vector.broadcast %45 : vector<16x1xf32> to vector<16x128xf32>
    %56 = arith.mulf %54, %55 : vector<16x128xf32>
    %57 = vector.broadcast %46 : vector<16x1xf32> to vector<16x128xf32>
    %58 = arith.addf %56, %57 : vector<16x128xf32>
    %59 = arith.addf %58, %43 : vector<16x128xf32>
    %cst_20 = arith.constant 0.000000e+00 : f32
    %60 = vector.broadcast %cst_20 : f32 to vector<16x128xf32>
    %61 = arith.maximumf %59, %60 : vector<16x128xf32>
    %62 = vector.extract_strided_slice %2 {offsets = [0, 10], sizes = [1, 1], strides = [1, 1]} : vector<16x11xf32> to vector<1x1xf32>
    %c0_21 = arith.constant 0 : index
    %c0_22 = arith.constant 0 : index
    %63 = vector.load %arg4[%c0_21, %c0_22] : memref<1x16xbf16, #tpu.memory_space<vmem>>, vector<1x16xbf16>
    %64 = arith.truncf %61 : vector<16x128xf32> to vector<16x128xbf16>
    %cst_23 = arith.constant dense<0.000000e+00> : vector<1x128xf32>
    %65 = tpu.matmul %63, %64, %cst_23 {dimension_numbers = #tpu.dot_dimension_numbers<[1], [0], [0], [1], [0, 0, 1, 1], [], []>} : vector<1x16xbf16>, vector<16x128xbf16>, vector<1x128xf32> -> vector<1x128xf32>
    %66 = vector.broadcast %62 : vector<1x1xf32> to vector<1x128xf32>
    %67 = arith.addf %65, %66 : vector<1x128xf32>
    %cst_24 = arith.constant 0.000000e+00 : f32
    %68 = vector.broadcast %cst_24 : f32 to vector<1x128xf32>
    %69 = arith.subf %68, %67 : vector<1x128xf32>
    %70 = math.exp %69 : vector<1x128xf32>
    %cst_25 = arith.constant 1.000000e+00 : f32
    %71 = vector.broadcast %cst_25 : f32 to vector<1x128xf32>
    %72 = arith.addf %71, %70 : vector<1x128xf32>
    %73 = tpu.reciprocal %72 {approx = true} : vector<1x128xf32> -> vector<1x128xf32>
    %c0_26 = arith.constant 0 : index
    %c0_27 = arith.constant 0 : index
    %74 = vector.load %arg6[%c0_26, %c0_27] : memref<1x128xf32, #tpu.memory_space<vmem>>, vector<1x128xf32>
    tpu.vector_store %arg6[%c0_26, %c0_27], %73 {strides = array<i32>} : memref<1x128xf32, #tpu.memory_space<vmem>>, vector<1x128xf32>,
    return
  }
  func.func @transform_0(%arg0: i32) -> (i32, i32) {
    %c0_i32 = arith.constant 0 : i32
    %c0_i32_0 = arith.constant 0 : i32
    return %c0_i32, %arg0 : i32, i32
  }
  func.func @transform_1(%arg0: i32) -> (i32, i32) {
    %c0_i32 = arith.constant 0 : i32
    %c0_i32_0 = arith.constant 0 : i32
    %c0_i32_1 = arith.constant 0 : i32
    return %c0_i32, %c0_i32_0 : i32, i32
  }
  func.func @transform_2(%arg0: i32) -> (i32, i32, i32) {
    %c0_i32 = arith.constant 0 : i32
    %c0_i32_0 = arith.constant 0 : i32
    %c0_i32_1 = arith.constant 0 : i32
    %c0_i32_2 = arith.constant 0 : i32
    return %c0_i32, %c0_i32_0, %c0_i32_1 : i32, i32, i32
  }
  func.func @transform_3(%arg0: i32) -> (i32, i32) {
    %c0_i32 = arith.constant 0 : i32
    %c0_i32_0 = arith.constant 0 : i32
    %c0_i32_1 = arith.constant 0 : i32
    return %c0_i32, %c0_i32_0 : i32, i32
  }
  func.func @transform_4(%arg0: i32) -> (i32, i32) {
    %c0_i32 = arith.constant 0 : i32
    %c0_i32_0 = arith.constant 0 : i32
    %c0_i32_1 = arith.constant 0 : i32
    return %c0_i32, %c0_i32_0 : i32, i32
  }
  func.func @transform_5(%arg0: i32) -> (i32, i32) {
    %c0_i32 = arith.constant 0 : i32
    %c0_i32_0 = arith.constant 0 : i32
    return %c0_i32, %arg0 : i32, i32
  }
}

</mosaic_0001>

<llo_original>
// kernel: tpu_custom_call.1
$region0: #{tpu_custom_call.1}
  #allocation0 [shape = 'u32[]', space=smem, size = 0x4, offset = 0x4, fixed_abs, tag = 'smem constant byte address 0x4 - core index']
  #allocation1 [shape = 'u32[144,128]{1,0:T(1,128)}', space=vmem, size = 0x12000, scoped, tag = 'internal scratch']
  %s0 = inlined_call_operand.hbm [shape: f32[9,128], index: 0, kind: input, shape index: {}]
  %s1 = inlined_call_operand.hbm [shape: bf16[16,9], index: 1, kind: input, shape index: {}]
  %s2 = inlined_call_operand.hbm [shape: bf16[3,16,16], index: 2, kind: input, shape index: {}]
  %s3 = inlined_call_operand.vmem [shape: bf16[1,16], index: 3, kind: input, shape index: {}]
  %s4 = inlined_call_operand.hbm [shape: f32[16,11], index: 4, kind: input, shape index: {}]
  %s5 = inlined_call_operand.hbm [shape: f32[1,128], index: 5, kind: output, shape index: {}]
  %s6 = sld [smem:[#allocation0]]
  $region46: #{tpu_custom_call.1} parent=0
    _
  %s8 = ssub.s32 1, %s6
  %s9 = scalar_select 0, %s8, %s6
  $region1: #{tpu_custom_call.1} parent=0
    #allocation2 [shape = 'u8[8192]{0}', space=vmem, size = 0x2000, scoped, tag = 'input window, operand 0, single buffered']
    #allocation3 [shape = 's32[1]{0}', space=sflag, size = 0x4, scoped, tag = 'scoped memory for tpu_custom_call.1']
    #allocation4 [shape = 's32[1]{0}', space=sflag, size = 0x4, scoped, tag = 'scoped memory for tpu_custom_call.1']
    #allocation5 [shape = 'u8[4096]{0}', space=vmem, size = 0x1000, scoped, tag = 'input window, operand 1, single buffered']
    #allocation6 [shape = 's32[1]{0}', space=sflag, size = 0x4, scoped, tag = 'scoped memory for tpu_custom_call.1']
    #allocation7 [shape = 'u8[12288]{0}', space=vmem, size = 0x3000, scoped, tag = 'input window, operand 2, single buffered']
    #allocation8 [shape = 'u8[8192]{0}', space=vmem, size = 0x2000, scoped, tag = 'input window, operand 4, single buffered']
    #allocation9 [shape = 's32[1]{0}', space=sflag, size = 0x4, scoped, tag = 'scoped memory for tpu_custom_call.1']
    #allocation10 [shape = 'u8[512]{0}', space=vmem, size = 0x400, scoped, tag = 'output window, operand 0, single buffered']
    %10 = vsyncpa [#allocation3], 0
    %11 = vsyncpa [#allocation6], 0
    %12 = vsyncpa [#allocation9], 0
    %13 = vsyncpa [#allocation4], 0
    // Predicated region
    $region2: #{tpu_custom_call.1} parent=1 // pred_check
      _
    $region3: #{tpu_custom_call.1} parent=1 // pred_check_branch
      %15 = sbr.rel (0) target = $region5
    $region4: #{tpu_custom_call.1} parent=1 // pred_region
      %s17 = ssub.s32 256, 256
      %18 = vsyncadd [#allocation3], %s17
      %s19 = sshll.u32 [#allocation2], 4
      %s20 = int_to_ptr.vmem [resolvable:$true] %s19
      %25 = dma.hbm_to_vmem [thread:$0]  %s0, 256, %s20, [#allocation3], 128, 128, 8
    $region5: #{tpu_custom_call.1} parent=1 // pred_fallthru
      _
    // Predicated region
    $region6: #{tpu_custom_call.1} parent=1 // pred_check
      _
    $region7: #{tpu_custom_call.1} parent=1 // pred_check_branch
      %27 = sbr.rel (0) target = $region9
    $region8: #{tpu_custom_call.1} parent=1 // pred_region
      %s29 = ssub.s32 128, 128
      %30 = vsyncadd [#allocation6], %s29
      %s31 = sshll.u32 [#allocation5], 4
      %s32 = int_to_ptr.vmem [resolvable:$true] %s31
      %37 = dma.hbm_to_vmem [thread:$0]  %s1, 128, %s32, [#allocation6], 64, 64, 4
    $region9: #{tpu_custom_call.1} parent=1 // pred_fallthru
      _
    // Predicated region
    $region10: #{tpu_custom_call.1} parent=1 // pred_check
      _
    $region11: #{tpu_custom_call.1} parent=1 // pred_check_branch
      %39 = sbr.rel (0) target = $region13
    $region12: #{tpu_custom_call.1} parent=1 // pred_region
      %s41 = ssub.s32 384, 384
      %42 = vsyncadd [#allocation6], %s41
      %s43 = sshll.u32 [#allocation7], 4
      %s44 = int_to_ptr.vmem [resolvable:$true] %s43
      %49 = dma.hbm_to_vmem [thread:$0]  %s2, 384, %s44, [#allocation6], 64, 64, 4
    $region13: #{tpu_custom_call.1} parent=1 // pred_fallthru
      _
    // Predicated region
    $region14: #{tpu_custom_call.1} parent=1 // pred_check
      _
    $region15: #{tpu_custom_call.1} parent=1 // pred_check_branch
      %51 = sbr.rel (0) target = $region17
    $region16: #{tpu_custom_call.1} parent=1 // pred_region
      _
    $region17: #{tpu_custom_call.1} parent=1 // pred_fallthru
      _
    // Predicated region
    $region18: #{tpu_custom_call.1} parent=1 // pred_check
      _
    $region19: #{tpu_custom_call.1} parent=1 // pred_check_branch
      %53 = sbr.rel (0) target = $region21
    $region20: #{tpu_custom_call.1} parent=1 // pred_region
      %s55 = ssub.s32 256, 256
      %56 = vsyncadd [#allocation9], %s55
      %s57 = sshll.u32 [#allocation8], 4
      %s58 = int_to_ptr.vmem [resolvable:$true] %s57
      %63 = dma.hbm_to_vmem [thread:$0]  %s4, 256, %s58, [#allocation9], 128, 128, 8
    $region21: #{tpu_custom_call.1} parent=1 // pred_fallthru
      _
    // Predicated region
    $region22: #{tpu_custom_call.1} parent=1 // pred_check
      _
    $region23: #{tpu_custom_call.1} parent=1 // pred_check_branch
      %65 = sbr.rel (0) target = $region25
    $region24: #{tpu_custom_call.1} parent=1 // pred_region
      %66 = dma.done [#allocation3], 256
    $region25: #{tpu_custom_call.1} parent=1 // pred_fallthru
      _
    // Predicated region
    $region26: #{tpu_custom_call.1} parent=1 // pred_check
      _
    $region27: #{tpu_custom_call.1} parent=1 // pred_check_branch
      %68 = sbr.rel (0) target = $region29
    $region28: #{tpu_custom_call.1} parent=1 // pred_region
      %69 = dma.done [#allocation6], 128
    $region29: #{tpu_custom_call.1} parent=1 // pred_fallthru
      _
    // Predicated region
    $region30: #{tpu_custom_call.1} parent=1 // pred_check
      _
    $region31: #{tpu_custom_call.1} parent=1 // pred_check_branch
      %71 = sbr.rel (0) target = $region33
    $region32: #{tpu_custom_call.1} parent=1 // pred_region
      %72 = dma.done [#allocation6], 384
    $region33: #{tpu_custom_call.1} parent=1 // pred_fallthru
      _
    // Predicated region
    $region34: #{tpu_custom_call.1} parent=1 // pred_check
      _
    $region35: #{tpu_custom_call.1} parent=1 // pred_check_branch
      %74 = sbr.rel (0) target = $region37
    $region36: #{tpu_custom_call.1} parent=1 // pred_region
      %75 = dma.done [#allocation9], 256
    $region37: #{tpu_custom_call.1} parent=1 // pred_fallthru
      _
    %v77 = vld [vmem:[#allocation2] sm:$0xff]
    %v78 = vld [vmem:[#allocation2 + $0x8] sm:$0x1]
    %v79 = vpack.c.bf16 %v78, %v77
    %v80 = vld [vmem:[#allocation8] sm:$0xff]
    %v81 = vld [vmem:[#allocation8 + $0x8] sm:$0xff]
    %v82 = vld [vmem:[#allocation5] sm:$0xf]
    %v83 = vld [vmem:[#allocation5 + $0x4] sm:$0xf]
    %85 = vset.pattern.permute.xlu0 0
    %86 = vperm.xlu0 %85, %v80
    %v87 = vpop.permute.xlu0 %86
    %90 = vset.pattern.permute.xlu0 0
    %91 = vperm.xlu0 %90, %v81
    %v92 = vpop.permute.xlu0 %91
    %v96 = vunpack.c.l.b16 %v82
    %v97 = vunpack.c.l.b16 %v83
    %v98 = vpack.c.b16 %v97, %v96
    %vm99 = vcmask 72704
    %v101 = vsel %vm99, %v98, 0
    %vm103 = vcmask 1043456
    %vm104 = vcmask 1044480
    %v105 = vsel %vm103, 4294967295, 65535
    %v106 = vsel %vm104, %v105, 0
    %v108 = vand.u32 %v79, %v106
    %110 = vmatprep.subr.bf16.mxu0 0
    %111 = vmatpush1.bf16.msra.mxu0 0
    %112 = vmatprep.subr.bf16.mxu0 0
    %113 = vmatpush1.bf16.msra.mxu0 0
    %114 = vmatprep.subr.bf16.mxu0 0
    %115 = vmatpush1.bf16.msra.mxu0 0
    %116 = vmatprep.subr.bf16.mxu0 0
    %117 = vmatpush1.bf16.msra.mxu0 0
    %118 = vmatprep.subr.bf16.mxu0 0
    %119 = vmatpush1.bf16.msra.mxu0 0
    %120 = vmatprep.subr.bf16.mxu0 0
    %121 = vmatpush1.bf16.msra.mxu0 0
    %122 = vmatprep.subr.bf16.mxu0 0
    %123 = vmatpush1.bf16.msra.mxu0 0
    %124 = vmatprep.subr.bf16.mxu0 0
    %125 = vmatpush1.bf16.msra.mxu0 %v108
    %126 = vmatprep.subr.bf16.mxu0 0
    %127 = vmatpush2.bf16.msra.mxu0 0
    %128 = vmatprep.subr.bf16.mxu0 0
    %129 = vmatpush2.bf16.msra.mxu0 0
    %130 = vmatprep.subr.bf16.mxu0 0
    %131 = vmatpush2.bf16.msra.mxu0 0
    %132 = vmatprep.subr.bf16.mxu0 0
    %133 = vmatpush2.bf16.msra.mxu0 0
    %134 = vmatprep.subr.bf16.mxu0 0
    %135 = vmatpush2.bf16.msra.mxu0 0
    %136 = vmatprep.subr.bf16.mxu0 0
    %137 = vmatpush2.bf16.msra.mxu0 0
    %138 = vmatprep.subr.bf16.mxu0 0
    %139 = vmatpush2.bf16.msra.mxu0 0
    %140 = vmatprep.subr.bf16.mxu0 0
    %141 = vmatpush2.bf16.msra.mxu0 0
    %142 = vmatprep.mubr.bf16.mxu0 0
    %143 = vmatmul.mubr.bf16.gmra.mxu0 %v101
    %v144 = vpop.f32.mrf.mxu0
    %v145 = vadd.f32 %v87, %v144
    %v146 = vpop.f32.mrf.mxu0
    %v147 = vpop.f32.mrf.mxu0
    %v148 = vadd.f32 %v92, %v147
    %v149 = vpop.f32.mrf.mxu0
    %150 = vdwg.mxu0
    %v151 = vld [vmem:[#allocation7] sm:$0xf]
    %v152 = vld [vmem:[#allocation7 + $0x4] sm:$0xf]
    %v153 = vpack.c.bf16 %v148, %v145
    %154 = vset.pattern.permute.xlu0 1
    %155 = vperm.xlu0 %154, %v80
    %v156 = vpop.permute.xlu0 %155
    %158 = vset.pattern.permute.xlu0 1
    %159 = vperm.xlu0 %158, %v81
    %v160 = vpop.permute.xlu0 %159
    %v164 = vunpack.c.l.b16 %v151
    %v165 = vunpack.c.l.b16 %v152
    %v166 = vpack.c.b16 %v165, %v164
    %vm167 = vcmask 130048
    %v169 = vsel %vm167, %v166, 0
    %171 = vmatprep.subr.bf16.mxu0 0
    %172 = vmatpush1.bf16.msra.mxu0 0
    %173 = vmatprep.subr.bf16.mxu0 0
    %174 = vmatpush1.bf16.msra.mxu0 0
    %175 = vmatprep.subr.bf16.mxu0 0
    %176 = vmatpush1.bf16.msra.mxu0 0
    %177 = vmatprep.subr.bf16.mxu0 0
    %178 = vmatpush1.bf16.msra.mxu0 0
    %179 = vmatprep.subr.bf16.mxu0 0
    %180 = vmatpush1.bf16.msra.mxu0 0
    %181 = vmatprep.subr.bf16.mxu0 0
    %182 = vmatpush1.bf16.msra.mxu0 0
    %183 = vmatprep.subr.bf16.mxu0 0
    %184 = vmatpush1.bf16.msra.mxu0 0
    %185 = vmatprep.subr.bf16.mxu0 0
    %186 = vmatpush1.bf16.msra.mxu0 %v153
    %187 = vmatprep.subr.bf16.mxu0 0
    %188 = vmatpush2.bf16.msra.mxu0 0
    %189 = vmatprep.subr.bf16.mxu0 0
    %190 = vmatpush2.bf16.msra.mxu0 0
    %191 = vmatprep.subr.bf16.mxu0 0
    %192 = vmatpush2.bf16.msra.mxu0 0
    %193 = vmatprep.subr.bf16.mxu0 0
    %194 = vmatpush2.bf16.msra.mxu0 0
    %195 = vmatprep.subr.bf16.mxu0 0
    %196 = vmatpush2.bf16.msra.mxu0 0
    %197 = vmatprep.subr.bf16.mxu0 0
    %198 = vmatpush2.bf16.msra.mxu0 0
    %199 = vmatprep.subr.bf16.mxu0 0
    %200 = vmatpush2.bf16.msra.mxu0 0
    %201 = vmatprep.subr.bf16.mxu0 0
    %202 = vmatpush2.bf16.msra.mxu0 0
    %203 = vmatprep.mubr.bf16.mxu0 0
    %204 = vmatmul.mubr.bf16.gmra.mxu0 %v169
    %v205 = vpop.f32.mrf.mxu0
    %v206 = vadd.f32 %v156, %v205
    %v207 = vpop.f32.mrf.mxu0
    %v208 = vpop.f32.mrf.mxu0
    %v209 = vadd.f32 %v160, %v208
    %v210 = vpop.f32.mrf.mxu0
    %211 = vdwg.mxu0
    %v212 = vmax.f32 %v206, 0.0
    %v213 = vmax.f32 %v209, 0.0
    %214 = vset.pattern.permute.xlu0 2
    %215 = vperm.xlu0 %214, %v80
    %v216 = vpop.permute.xlu0 %215
    %218 = vset.pattern.permute.xlu0 2
    %219 = vperm.xlu0 %218, %v81
    %v220 = vpop.permute.xlu0 %219
    %v222 = vmul.f32 %v212, %v216
    %v223 = vmul.f32 %v213, %v220
    %224 = vset.pattern.permute.xlu0 3
    %225 = vperm.xlu0 %224, %v80
    %v226 = vpop.permute.xlu0 %225
    %228 = vset.pattern.permute.xlu0 3
    %229 = vperm.xlu0 %228, %v81
    %v230 = vpop.permute.xlu0 %229
    %v232 = vadd.f32 %v222, %v226
    %v233 = vadd.f32 %v223, %v230
    %v234 = vadd.f32 %v232, %v145
    %v235 = vadd.f32 %v233, %v148
    %v236 = vmax.f32 %v234, 0.0
    %v237 = vmax.f32 %v235, 0.0
    %s238 = scalar_lea.vmem [#allocation7], 8
    %v239 = vld [vmem:[%s238] sm:$0xf]
    %v240 = vld [vmem:[%s238 + $0x4] sm:$0xf]
    %v241 = vpack.c.bf16 %v237, %v236
    %242 = vset.pattern.permute.xlu0 4
    %243 = vperm.xlu0 %242, %v80
    %v244 = vpop.permute.xlu0 %243
    %246 = vset.pattern.permute.xlu0 4
    %247 = vperm.xlu0 %246, %v81
    %v248 = vpop.permute.xlu0 %247
    %v252 = vunpack.c.l.b16 %v239
    %v253 = vunpack.c.l.b16 %v240
    %v254 = vpack.c.b16 %v253, %v252
    %v256 = vsel %vm167, %v254, 0
    %258 = vmatprep.subr.bf16.mxu0 0
    %259 = vmatpush1.bf16.msra.mxu0 0
    %260 = vmatprep.subr.bf16.mxu0 0
    %261 = vmatpush1.bf16.msra.mxu0 0
    %262 = vmatprep.subr.bf16.mxu0 0
    %263 = vmatpush1.bf16.msra.mxu0 0
    %264 = vmatprep.subr.bf16.mxu0 0
    %265 = vmatpush1.bf16.msra.mxu0 0
    %266 = vmatprep.subr.bf16.mxu0 0
    %267 = vmatpush1.bf16.msra.mxu0 0
    %268 = vmatprep.subr.bf16.mxu0 0
    %269 = vmatpush1.bf16.msra.mxu0 0
    %270 = vmatprep.subr.bf16.mxu0 0
    %271 = vmatpush1.bf16.msra.mxu0 0
    %272 = vmatprep.subr.bf16.mxu0 0
    %273 = vmatpush1.bf16.msra.mxu0 %v241
    %274 = vmatprep.subr.bf16.mxu0 0
    %275 = vmatpush2.bf16.msra.mxu0 0
    %276 = vmatprep.subr.bf16.mxu0 0
    %277 = vmatpush2.bf16.msra.mxu0 0
    %278 = vmatprep.subr.bf16.mxu0 0
    %279 = vmatpush2.bf16.msra.mxu0 0
    %280 = vmatprep.subr.bf16.mxu0 0
    %281 = vmatpush2.bf16.msra.mxu0 0
    %282 = vmatprep.subr.bf16.mxu0 0
    %283 = vmatpush2.bf16.msra.mxu0 0
    %284 = vmatprep.subr.bf16.mxu0 0
    %285 = vmatpush2.bf16.msra.mxu0 0
    %286 = vmatprep.subr.bf16.mxu0 0
    %287 = vmatpush2.bf16.msra.mxu0 0
    %288 = vmatprep.subr.bf16.mxu0 0
    %289 = vmatpush2.bf16.msra.mxu0 0
    %290 = vmatprep.mubr.bf16.mxu0 0
    %291 = vmatmul.mubr.bf16.gmra.mxu0 %v256
    %v292 = vpop.f32.mrf.mxu0
    %v293 = vadd.f32 %v244, %v292
    %v294 = vpop.f32.mrf.mxu0
    %v295 = vpop.f32.mrf.mxu0
    %v296 = vadd.f32 %v248, %v295
    %v297 = vpop.f32.mrf.mxu0
    %298 = vdwg.mxu0
    %v299 = vmax.f32 %v293, 0.0
    %v300 = vmax.f32 %v296, 0.0
    %301 = vset.pattern.permute.xlu0 5
    %302 = vperm.xlu0 %301, %v80
    %v303 = vpop.permute.xlu0 %302
    %305 = vset.pattern.permute.xlu0 5
    %306 = vperm.xlu0 %305, %v81
    %v307 = vpop.permute.xlu0 %306
    %v309 = vmul.f32 %v299, %v303
    %v310 = vmul.f32 %v300, %v307
    %311 = vset.pattern.permute.xlu0 6
    %312 = vperm.xlu0 %311, %v80
    %v313 = vpop.permute.xlu0 %312
    %315 = vset.pattern.permute.xlu0 6
    %316 = vperm.xlu0 %315, %v81
    %v317 = vpop.permute.xlu0 %316
    %v319 = vadd.f32 %v309, %v313
    %v320 = vadd.f32 %v310, %v317
    %v321 = vadd.f32 %v319, %v236
    %v322 = vadd.f32 %v320, %v237
    %v323 = vmax.f32 %v321, 0.0
    %v324 = vmax.f32 %v322, 0.0
    %s325 = scalar_lea.vmem [#allocation7], 16
    %v326 = vld [vmem:[%s325] sm:$0xf]
    %v327 = vld [vmem:[%s325 + $0x4] sm:$0xf]
    %v328 = vpack.c.bf16 %v324, %v323
    %329 = vset.pattern.permute.xlu0 7
    %330 = vperm.xlu0 %329, %v80
    %v331 = vpop.permute.xlu0 %330
    %333 = vset.pattern.permute.xlu0 7
    %334 = vperm.xlu0 %333, %v81
    %v335 = vpop.permute.xlu0 %334
    %v339 = vunpack.c.l.b16 %v326
    %v340 = vunpack.c.l.b16 %v327
    %v341 = vpack.c.b16 %v340, %v339
    %v343 = vsel %vm167, %v341, 0
    %345 = vmatprep.subr.bf16.mxu0 0
    %346 = vmatpush1.bf16.msra.mxu0 0
    %347 = vmatprep.subr.bf16.mxu0 0
    %348 = vmatpush1.bf16.msra.mxu0 0
    %349 = vmatprep.subr.bf16.mxu0 0
    %350 = vmatpush1.bf16.msra.mxu0 0
    %351 = vmatprep.subr.bf16.mxu0 0
    %352 = vmatpush1.bf16.msra.mxu0 0
    %353 = vmatprep.subr.bf16.mxu0 0
    %354 = vmatpush1.bf16.msra.mxu0 0
    %355 = vmatprep.subr.bf16.mxu0 0
    %356 = vmatpush1.bf16.msra.mxu0 0
    %357 = vmatprep.subr.bf16.mxu0 0
    %358 = vmatpush1.bf16.msra.mxu0 0
    %359 = vmatprep.subr.bf16.mxu0 0
    %360 = vmatpush1.bf16.msra.mxu0 %v328
    %361 = vmatprep.subr.bf16.mxu0 0
    %362 = vmatpush2.bf16.msra.mxu0 0
    %363 = vmatprep.subr.bf16.mxu0 0
    %364 = vmatpush2.bf16.msra.mxu0 0
    %365 = vmatprep.subr.bf16.mxu0 0
    %366 = vmatpush2.bf16.msra.mxu0 0
    %367 = vmatprep.subr.bf16.mxu0 0
    %368 = vmatpush2.bf16.msra.mxu0 0
    %369 = vmatprep.subr.bf16.mxu0 0
    %370 = vmatpush2.bf16.msra.mxu0 0
    %371 = vmatprep.subr.bf16.mxu0 0
    %372 = vmatpush2.bf16.msra.mxu0 0
    %373 = vmatprep.subr.bf16.mxu0 0
    %374 = vmatpush2.bf16.msra.mxu0 0
    %375 = vmatprep.subr.bf16.mxu0 0
    %376 = vmatpush2.bf16.msra.mxu0 0
    %377 = vmatprep.mubr.bf16.mxu0 0
    %378 = vmatmul.mubr.bf16.gmra.mxu0 %v343
    %v379 = vpop.f32.mrf.mxu0
    %v380 = vadd.f32 %v331, %v379
    %v381 = vpop.f32.mrf.mxu0
    %v382 = vpop.f32.mrf.mxu0
    %v383 = vadd.f32 %v335, %v382
    %v384 = vpop.f32.mrf.mxu0
    %385 = vdwg.mxu0
    %v386 = vmax.f32 %v380, 0.0
    %v387 = vmax.f32 %v383, 0.0
    %388 = vset.pattern.permute.xlu0 8
    %389 = vperm.xlu0 %388, %v80
    %v390 = vpop.permute.xlu0 %389
    %392 = vset.pattern.permute.xlu0 8
    %393 = vperm.xlu0 %392, %v81
    %v394 = vpop.permute.xlu0 %393
    %v396 = vmul.f32 %v386, %v390
    %v397 = vmul.f32 %v387, %v394
    %398 = vset.pattern.permute.xlu0 9
    %399 = vperm.xlu0 %398, %v80
    %v400 = vpop.permute.xlu0 %399
    %402 = vset.pattern.permute.xlu0 9
    %403 = vperm.xlu0 %402, %v81
    %v404 = vpop.permute.xlu0 %403
    %v406 = vadd.f32 %v396, %v400
    %v407 = vadd.f32 %v397, %v404
    %v408 = vadd.f32 %v406, %v323
    %v409 = vadd.f32 %v407, %v324
    %v410 = vmax.f32 %v408, 0.0
    %v411 = vmax.f32 %v409, 0.0
    %v412 = vld [vmem:[%s3] sm:$0x1]
    %v413 = vpack.c.bf16 %v411, %v410
    %414 = vset.pattern.permute.xlu0 10
    %415 = vperm.xlu0 %414, %v80
    %v416 = vpop.permute.xlu0 %415
    %v419 = vsel %vm167, %v412, 0
    %421 = vmatprep.subr.bf16.mxu0 0
    %422 = vmatpush1.bf16.msra.mxu0 0
    %423 = vmatprep.subr.bf16.mxu0 0
    %424 = vmatpush1.bf16.msra.mxu0 0
    %425 = vmatprep.subr.bf16.mxu0 0
    %426 = vmatpush1.bf16.msra.mxu0 0
    %427 = vmatprep.subr.bf16.mxu0 0
    %428 = vmatpush1.bf16.msra.mxu0 0
    %429 = vmatprep.subr.bf16.mxu0 0
    %430 = vmatpush1.bf16.msra.mxu0 0
    %431 = vmatprep.subr.bf16.mxu0 0
    %432 = vmatpush1.bf16.msra.mxu0 0
    %433 = vmatprep.subr.bf16.mxu0 0
    %434 = vmatpush1.bf16.msra.mxu0 0
    %435 = vmatprep.subr.bf16.mxu0 0
    %436 = vmatpush1.bf16.msra.mxu0 %v413
    %437 = vmatprep.subr.bf16.mxu0 0
    %438 = vmatpush2.bf16.msra.mxu0 0
    %439 = vmatprep.subr.bf16.mxu0 0
    %440 = vmatpush2.bf16.msra.mxu0 0
    %441 = vmatprep.subr.bf16.mxu0 0
    %442 = vmatpush2.bf16.msra.mxu0 0
    %443 = vmatprep.subr.bf16.mxu0 0
    %444 = vmatpush2.bf16.msra.mxu0 0
    %445 = vmatprep.subr.bf16.mxu0 0
    %446 = vmatpush2.bf16.msra.mxu0 0
    %447 = vmatprep.subr.bf16.mxu0 0
    %448 = vmatpush2.bf16.msra.mxu0 0
    %449 = vmatprep.subr.bf16.mxu0 0
    %450 = vmatpush2.bf16.msra.mxu0 0
    %451 = vmatprep.subr.bf16.mxu0 0
    %452 = vmatpush2.bf16.msra.mxu0 0
    %453 = vmatprep.mubr.bf16.mxu0 0
    %454 = vmatmul.mubr.bf16.gmra.mxu0 %v419
    %v455 = vpop.f32.mrf.mxu0
    %v456 = vadd.f32 %v416, %v455
    %v457 = vpop.f32.mrf.mxu0
    %v458 = vpop.f32.mrf.mxu0
    %v459 = vpop.f32.mrf.mxu0
    %460 = vdwg.mxu0
    %v461 = vsub.f32 0.0, %v456
    %v462 = vmul.f32 %v461, 1.442695
    %v463 = vpow.pop %v462
    %v464 = vadd.f32 %v463, 1.0
    %v465 = vrcp.pop %v464
    %466 = vst [vmem:[#allocation10] sm:$0x1] %v465
    // Predicated region
    $region38: #{tpu_custom_call.1} parent=1 // pred_check
      _
    $region39: #{tpu_custom_call.1} parent=1 // pred_check_branch
      %468 = sbr.rel (0) target = $region41
    $region40: #{tpu_custom_call.1} parent=1 // pred_region
      %s470 = ssub.s32 16, 16
      %471 = vsyncadd [#allocation4], %s470
      %s473 = sshll.u32 [#allocation10], 4
      %s474 = int_to_ptr.vmem [resolvable:$true] %s473
      %476 = dma.vmem_to_hbm [thread:$0]  %s474, 16, %s5, [#allocation4]
    $region41: #{tpu_custom_call.1} parent=1 // pred_fallthru
      _
    // Predicated region
    $region42: #{tpu_custom_call.1} parent=1 // pred_check
      _
    $region43: #{tpu_custom_call.1} parent=1 // pred_check_branch
      %478 = sbr.rel (0) target = $region45
    $region44: #{tpu_custom_call.1} parent=1 // pred_region
      %479 = dma.done [#allocation4], 16
    $region45: #{tpu_custom_call.1} parent=1 // pred_fallthru
      _
    %480 = vsyncpa [#allocation3], 1
    %481 = vsyncpa [#allocation6], 1
    %482 = vsyncpa [#allocation9], 1
    %483 = vsyncpa [#allocation4], 1

</llo_original>
